<compile_context>
chip_gen: v6e
topology: v6e:2x2x1
jax: 0.10.0
libtpu: 0.0.40
codegen_flags: <defaults>
</compile_context>

<pallas_src>
import functools

import jax
import jax.numpy as jnp
from jax.experimental import pallas as pl
from jax.experimental.pallas import tpu as pltpu


_NEG_BIG = -1e30               # finite "minus infinity" for masked class lanes
_TARGET_BLOCK_ELEMS = 512 * 1024   # ~2 MiB of f32 per input block (roofline sweet spot)
_MIN_ROW_STEPS = 8             # give v7x megacore enough row tiles to shard
_DEFAULT_MAX_SINGLE_PASS_C = 8192
_DEFAULT_TILE_C = 2048


def _cdiv(a, b):
    return (a + b - 1) // b


def _round_up(v, m):
    return _cdiv(v, m) * m


def _choose_tile_rows(batch, block_cols):
    """Row-tile height: multiple of 8 (or full extent), sized to ~_TARGET_BLOCK_ELEMS,
    capped so the row grid has >= _MIN_ROW_STEPS steps when possible."""
    if batch <= 8:
        return batch  # full extent (legal even when not a multiple of 8)
    tr = max(8, (_TARGET_BLOCK_ELEMS // max(block_cols, 1)) // 8 * 8)
    tr = min(tr, max(8, _round_up(_cdiv(batch, _MIN_ROW_STEPS), 8)))
    tr = min(tr, (batch // 8) * 8)   # never exceed the array extent
    return max(tr, 8)


# ---------------------------------------------------------------------------
# Single-pass kernel: whole class axis in one block.
# ---------------------------------------------------------------------------
def _ce_rows_kernel(x_ref, t_ref, out_ref):
    """One row tile [TR, C] -> per-row soft-target CE loss [TR, 1].

    Folded algebra (no logp materialization):
        loss_r = lse_r * sum_c(t_rc) - sum_c(t_rc * (x_rc - m_r))
    """
    x_native = x_ref[...]
    # Max on the native dtype (bf16 ordering is exact), upcast afterwards.
    m = jnp.max(x_native, axis=-1, keepdims=True).astype(jnp.float32)
    shifted = x_native.astype(jnp.float32) - m
    t = t_ref[...].astype(jnp.float32)

    lse = jnp.log(jnp.sum(jnp.exp(shifted), axis=-1, keepdims=True))
    sum_t = jnp.sum(t, axis=-1, keepdims=True)
    dot_ts = jnp.sum(t * shifted, axis=-1, keepdims=True)

    out_ref[...] = lse * sum_t - dot_ts


# ---------------------------------------------------------------------------
# Class-tiled kernel: online logsumexp over class chunks (large vocab).
# ---------------------------------------------------------------------------
def _ce_rows_classtiled_kernel(x_ref, t_ref, out_ref,
                               m_ref, l_ref, st_ref, stx_ref,
                               *, tile_c, num_classes, mask_last):
    k = pl.program_id(1)

    @pl.when(k == 0)
    def _init():
        m_ref[...] = jnp.full(m_ref.shape, _NEG_BIG, m_ref.dtype)
        l_ref[...] = jnp.zeros(l_ref.shape, l_ref.dtype)
        st_ref[...] = jnp.zeros(st_ref.shape, st_ref.dtype)
        stx_ref[...] = jnp.zeros(stx_ref.shape, stx_ref.dtype)

    x = x_ref[...].astype(jnp.float32)
    t = t_ref[...].astype(jnp.float32)

    if mask_last:
        # Only the last class chunk can overhang; the compare is cheap VPU work.
        col = k * tile_c + jax.lax.broadcasted_iota(jnp.int32, x.shape, 1)
        valid = col < num_classes
        x = jnp.where(valid, x, _NEG_BIG)
        t = jnp.where(valid, t, 0.0)

    chunk_max = jnp.max(x, axis=-1, keepdims=True)
    m_new = jnp.maximum(m_ref[...], chunk_max)
    l_ref[...] = (l_ref[...] * jnp.exp(m_ref[...] - m_new)
                  + jnp.sum(jnp.exp(x - m_new), axis=-1, keepdims=True))
    m_ref[...] = m_new
    st_ref[...] = st_ref[...] + jnp.sum(t, axis=-1, keepdims=True)
    stx_ref[...] = stx_ref[...] + jnp.sum(t * x, axis=-1, keepdims=True)

    @pl.when(k == pl.num_programs(1) - 1)
    def _finalize():
        lse = m_ref[...] + jnp.log(l_ref[...])
        out_ref[...] = lse * st_ref[...] - stx_ref[...]


# ---------------------------------------------------------------------------
# Wrapper
# ---------------------------------------------------------------------------
def cross_entropy(inp, target, *,
                  max_single_pass_classes=_DEFAULT_MAX_SINGLE_PASS_C,
                  class_tile=_DEFAULT_TILE_C):
    """Pallas cross-entropy: sum(-log_softmax(inp, -1) * target) / inp.shape[0]."""
    assert inp.shape == target.shape and inp.ndim == 2
    B, C = inp.shape

    use_class_tiling = (C > max_single_pass_classes) and (C > 128)

    if use_class_tiling:
        tile_c = max(128, min(class_tile, (C // 128) * 128))
        block_cols = tile_c
    else:
        tile_c = None
        block_cols = C

    tile_rows = _choose_tile_rows(B, block_cols)

    # VMEM accounting: double-buffered inputs at their native dtypes plus f32
    # intermediates (upcasts, shifted, exp, products); stay below v7x's 64 MiB.
    in_itemsize = jnp.dtype(inp.dtype).itemsize + jnp.dtype(target.dtype).itemsize
    block_elems = tile_rows * block_cols
    vmem_need = 2 * block_elems * in_itemsize + 4 * block_elems * 4 + (4 << 20)
    vmem_limit = int(min(60 << 20, max(32 << 20, vmem_need)))

    if use_class_tiling:
        kernel = functools.partial(
            _ce_rows_classtiled_kernel,
            tile_c=tile_c, num_classes=C, mask_last=(C % tile_c != 0))
        grid = (_cdiv(B, tile_rows), _cdiv(C, tile_c))
        row_losses = pl.pallas_call(
            kernel,
            out_shape=jax.ShapeDtypeStruct((B, 1), jnp.float32),
            grid_spec=pltpu.PrefetchScalarGridSpec(
                num_scalar_prefetch=0,
                grid=grid,
                in_specs=[
                    pl.BlockSpec((tile_rows, tile_c), lambda i, k: (i, k)),
                    pl.BlockSpec((tile_rows, tile_c), lambda i, k: (i, k)),
                ],
                out_specs=pl.BlockSpec((tile_rows, 1), lambda i, k: (i, 0)),
                scratch_shapes=[pltpu.VMEM((tile_rows, 1), jnp.float32)] * 4,
            ),
            compiler_params=pltpu.CompilerParams(
                dimension_semantics=("parallel", "arbitrary"),
                vmem_limit_bytes=vmem_limit,
            ),
        )(inp, target)
    else:
        grid = (_cdiv(B, tile_rows),)
        row_losses = pl.pallas_call(
            _ce_rows_kernel,
            out_shape=jax.ShapeDtypeStruct((B, 1), jnp.float32),
            grid_spec=pltpu.PrefetchScalarGridSpec(
                num_scalar_prefetch=0,
                grid=grid,
                in_specs=[
                    pl.BlockSpec((tile_rows, C), lambda i: (i, 0)),
                    pl.BlockSpec((tile_rows, C), lambda i: (i, 0)),
                ],
                out_specs=pl.BlockSpec((tile_rows, 1), lambda i: (i, 0)),
            ),
            compiler_params=pltpu.CompilerParams(
                dimension_semantics=("parallel",),
                vmem_limit_bytes=vmem_limit,
            ),
        )(inp, target)

    # Tiny final reduction (B scalars) + normalization stay in XLA.
    return jnp.sum(row_losses) / jnp.float32(B)


def _reference(inp, target):
    logp = jax.nn.log_softmax(inp.astype(jnp.float32), axis=-1)
    return jnp.sum(-logp * target.astype(jnp.float32)) / inp.shape[0]


if __name__ == "__main__":
    key = jax.random.PRNGKey(0)
    k1, k2, k3, k4 = jax.random.split(key, 4)

    # 1) Small f32 shapes consistent with the module: batch=16, classes=32.
    B, C = 16, 32
    x = jax.random.normal(k1, (B, C), dtype=jnp.float32)
    t = jax.nn.softmax(jax.random.normal(k2, (B, C), dtype=jnp.float32), axis=-1)
    loss = cross_entropy(x, t)
    jax.block_until_ready(loss)
    ref = _reference(x, t)
    assert jnp.allclose(loss, ref, rtol=1e-5, atol=1e-5), (loss, ref)

    # 2) Ragged batch, non-multiple-of-128 classes, bf16 inputs: exercises the
    #    un-padded partial row block + full-extent (non-128-aligned) class block.
    B2, C2 = 13, 200
    x2 = jax.random.normal(k3, (B2, C2), dtype=jnp.bfloat16)
    t2 = jax.nn.softmax(
        jax.random.normal(k4, (B2, C2), dtype=jnp.float32), axis=-1
    ).astype(jnp.bfloat16)
    loss2 = cross_entropy(x2, t2)
    jax.block_until_ready(loss2)
    ref2 = _reference(x2, t2)
    assert jnp.allclose(loss2, ref2, rtol=1e-4, atol=1e-4), (loss2, ref2)

    # 3) Force the class-tiled online-logsumexp path (large-vocab code path) on
    #    the same small data: 128-wide class chunks with a masked partial chunk.
    loss3 = cross_entropy(x2, t2, max_single_pass_classes=64)
    jax.block_until_ready(loss3)
    assert jnp.allclose(loss3, ref2, rtol=1e-4, atol=1e-3), (loss3, ref2)

    print("KERNEL_OK")
</pallas_src>

<mosaic_0001>
module attributes {stable_mosaic.version = 11 : i64} {
  func.func @_ce_rows_kernel(%arg0: i32, %arg1: memref<8x32xf32, #tpu.memory_space<vmem>>, %arg2: memref<8x32xf32, #tpu.memory_space<vmem>>, %arg3: memref<8x1xf32, #tpu.memory_space<vmem>>) attributes {dimension_semantics = [#tpu.dimension_semantics<parallel>], iteration_bounds = array<i64: 2>, scalar_prefetch = 0 : i64, scratch_operands = 0 : i64, tpu.core_type = #tpu.core_type<tc>, window_params = [{transform_indices = @transform_0, window_bounds = array<i64: 8, 32>}, {transform_indices = @transform_1, window_bounds = array<i64: 8, 32>}, {transform_indices = @transform_2, window_bounds = array<i64: 8, 1>}]} {
    %c0 = arith.constant 0 : index
    %c0_0 = arith.constant 0 : index
    %0 = vector.load %arg1[%c0, %c0_0] : memref<8x32xf32, #tpu.memory_space<vmem>>, vector<8x32xf32>
    %cst = arith.constant dense<0xFF800000> : vector<8xf32>
    %1 = vector.multi_reduction <maximumf>, %0, %cst [1] : vector<8x32xf32> to vector<8xf32>
    %2 = vector.shape_cast %1 : vector<8xf32> to vector<8x1xf32>
    %3 = vector.broadcast %2 : vector<8x1xf32> to vector<8x32xf32>
    %4 = arith.subf %0, %3 : vector<8x32xf32>
    %c0_1 = arith.constant 0 : index
    %c0_2 = arith.constant 0 : index
    %5 = vector.load %arg2[%c0_1, %c0_2] : memref<8x32xf32, #tpu.memory_space<vmem>>, vector<8x32xf32>
    %6 = math.exp %4 : vector<8x32xf32>
    %cst_3 = arith.constant dense<0.000000e+00> : vector<8xf32>
    %7 = vector.multi_reduction <add>, %6, %cst_3 [1] : vector<8x32xf32> to vector<8xf32>
    %8 = vector.shape_cast %7 : vector<8xf32> to vector<8x1xf32>
    %9 = math.log %8 : vector<8x1xf32>
    %cst_4 = arith.constant dense<0.000000e+00> : vector<8xf32>
    %10 = vector.multi_reduction <add>, %5, %cst_4 [1] : vector<8x32xf32> to vector<8xf32>
    %11 = vector.shape_cast %10 : vector<8xf32> to vector<8x1xf32>
    %12 = arith.mulf %5, %4 : vector<8x32xf32>
    %cst_5 = arith.constant dense<0.000000e+00> : vector<8xf32>
    %13 = vector.multi_reduction <add>, %12, %cst_5 [1] : vector<8x32xf32> to vector<8xf32>
    %14 = vector.shape_cast %13 : vector<8xf32> to vector<8x1xf32>
    %15 = arith.mulf %9, %11 : vector<8x1xf32>
    %16 = arith.subf %15, %14 : vector<8x1xf32>
    %c0_6 = arith.constant 0 : index
    %c0_7 = arith.constant 0 : index
    %17 = vector.load %arg3[%c0_6, %c0_7] : memref<8x1xf32, #tpu.memory_space<vmem>>, vector<8x1xf32>
    tpu.vector_store %arg3[%c0_6, %c0_7], %16 {strides = array<i32>} : memref<8x1xf32, #tpu.memory_space<vmem>>, vector<8x1xf32>,
    return
  }
  func.func @transform_0(%arg0: i32) -> (i32, i32) {
    %c0_i32 = arith.constant 0 : i32
    %c0_i32_0 = arith.constant 0 : i32
    return %arg0, %c0_i32 : i32, i32
  }
  func.func @transform_1(%arg0: i32) -> (i32, i32) {
    %c0_i32 = arith.constant 0 : i32
    %c0_i32_0 = arith.constant 0 : i32
    return %arg0, %c0_i32 : i32, i32
  }
  func.func @transform_2(%arg0: i32) -> (i32, i32) {
    %c0_i32 = arith.constant 0 : i32
    %c0_i32_0 = arith.constant 0 : i32
    return %arg0, %c0_i32 : i32, i32
  }
}

</mosaic_0001>

<llo_original>
// kernel: tpu_custom_call.1
$region0: #{tpu_custom_call.1}
  #allocation0 [shape = 'u32[]', space=smem, size = 0x4, offset = 0x4, fixed_abs, tag = 'smem constant byte address 0x4 - core index']
  #allocation1 [shape = 'u32[144,128]{1,0:T(1,128)}', space=vmem, size = 0x12000, scoped, tag = 'internal scratch']
  %s0 = inlined_call_operand.hbm [shape: f32[16,32], index: 0, kind: input, shape index: {}]
  %s1 = inlined_call_operand.hbm [shape: f32[16,32], index: 1, kind: input, shape index: {}]
  %s2 = inlined_call_operand.vmem [shape: f32[16,1], index: 2, kind: output, shape index: {}]
  %s3 = sld [smem:[#allocation0]]
  $region49: #{tpu_custom_call.1} parent=0
    _
  %s5 = ssub.s32 1, %s3
  %s6 = scalar_select 0, %s5, %s3
  $region1: #{tpu_custom_call.1} parent=0
    #allocation2 [shape = 'u8[8192]{0}', space=vmem, size = 0x2000, scoped, tag = 'input window, operand 0']
    #allocation3 [shape = 's32[2]{0}', space=sflag, size = 0x8, scoped, tag = 'scoped memory for tpu_custom_call.1']
    #allocation4 [shape = 'u8[8192]{0}', space=vmem, size = 0x2000, scoped, tag = 'input window, operand 1']
    #allocation5 [shape = 's32[2]{0}', space=sflag, size = 0x8, scoped, tag = 'scoped memory for tpu_custom_call.1']
    %7 = vsyncpa [#allocation3], 0
    %s8 = scalar_lea.sflag [#allocation3], 1
    %9 = vsyncpa %s8, 0
    %10 = vsyncpa [#allocation5], 0
    %s11 = scalar_lea.sflag [#allocation5], 1
    %12 = vsyncpa %s11, 0
    loop: start=0, step=1, limit=4
    $region2: #{tpu_custom_call.1} parent=1 // loop_pre_header
      _
    $region3: #{tpu_custom_call.1} parent=1 // loop_header
      %s14 = sphi 0, %s18
      %p15 = scmp.ge.s32.totalorder %s14, 4
      %s24 = sphi 0, %s26
      %s27 = sphi 0, %s24
      %s28 = sphi 0, %s27
      %s44 = sphi 0, %s28
      %s50 = sphi 0, %s52
      %s53 = sphi 0, %s50
      %s54 = sphi 0, %s53
      %s70 = sphi 0, %s54
      %s76 = sphi 0, %s78
      %s79 = sphi 0, %s76
      %s80 = sphi 0, %s79
      %s96 = sphi 0, %s80
    $region4: #{tpu_custom_call.1} parent=1 // loop_header_branch
      %17 = sbr.rel (%p15) target = $region8
    $region5: #{tpu_custom_call.1} parent=1 // loop_body
      %s19 = ssub.s32 %s14, 1
      %s20 = ssub.s32 %s14, 2
      %s21 = sadd.s32 %s14, 1
      %s22 = ssub.s32 %s14, %s21
      %p23 = scmp.eq.s32.totalorder %s22, 0
      %s25 = sadd.s32 %s24, 1
      %s26 = scalar_select %p23, %s24, %s25
      %p29 = pneg %p23
      %p30 = scmp.eq.s32.totalorder %s14, 1
      %p31 = por %p29, %p30
      %p32 = scmp.ne.s32.totalorder %s24, %s27
      %p33 = scmp.eq.s32.totalorder %s14, 0
      %p34 = por %p32, %p33
      %p35 = scmp.ne.s32.totalorder %s24, %s27
      %p36 = scmp.eq.s32.totalorder %s19, 1
      %p37 = por %p35, %p36
      %p38 = scmp.ne.s32.totalorder %s27, %s28
      %p39 = scmp.eq.s32.totalorder %s19, 0
      %p40 = por %p38, %p39
      %p41 = scmp.ne.s32.totalorder %s27, %s28
      %p42 = scmp.eq.s32.totalorder %s20, 1
      %p43 = por %p41, %p42
      %p45 = scmp.ne.s32.totalorder %s28, %s44
      %p46 = scmp.eq.s32.totalorder %s20, 0
      %p47 = por %p45, %p46
      %s48 = ssub.s32 %s14, %s21
      %p49 = scmp.eq.s32.totalorder %s48, 0
      %s51 = sadd.s32 %s50, 1
      %s52 = scalar_select %p49, %s50, %s51
      %p55 = pneg %p49
      %p56 = scmp.eq.s32.totalorder %s14, 1
      %p57 = por %p55, %p56
      %p58 = scmp.ne.s32.totalorder %s50, %s53
      %p59 = scmp.eq.s32.totalorder %s14, 0
      %p60 = por %p58, %p59
      %p61 = scmp.ne.s32.totalorder %s50, %s53
      %p62 = scmp.eq.s32.totalorder %s19, 1
      %p63 = por %p61, %p62
      %p64 = scmp.ne.s32.totalorder %s53, %s54
      %p65 = scmp.eq.s32.totalorder %s19, 0
      %p66 = por %p64, %p65
      %p67 = scmp.ne.s32.totalorder %s53, %s54
      %p68 = scmp.eq.s32.totalorder %s20, 1
      %p69 = por %p67, %p68
      %p71 = scmp.ne.s32.totalorder %s54, %s70
      %p72 = scmp.eq.s32.totalorder %s20, 0
      %p73 = por %p71, %p72
      %s74 = ssub.s32 %s14, %s21
      %p75 = scmp.eq.s32.totalorder %s74, 0
      %s77 = sadd.s32 %s76, 1
      %s78 = scalar_select %p75, %s76, %s77
      %p81 = pneg %p75
      %p82 = scmp.eq.s32.totalorder %s14, 1
      %p83 = por %p81, %p82
      %p84 = scmp.ne.s32.totalorder %s76, %s79
      %p85 = scmp.eq.s32.totalorder %s14, 0
      %p86 = por %p84, %p85
      %p87 = scmp.ne.s32.totalorder %s76, %s79
      %p88 = scmp.eq.s32.totalorder %s19, 1
      %p89 = por %p87, %p88
      %p90 = scmp.ne.s32.totalorder %s79, %s80
      %p91 = scmp.eq.s32.totalorder %s19, 0
      %p92 = por %p90, %p91
      %p93 = scmp.ne.s32.totalorder %s79, %s80
      %p94 = scmp.eq.s32.totalorder %s20, 1
      %p95 = por %p93, %p94
      %p97 = scmp.ne.s32.totalorder %s80, %s96
      %p98 = scmp.eq.s32.totalorder %s20, 0
      %p99 = por %p97, %p98
      %p100 = scmp.le.s32.totalorder 1, %s14
      %p101 = scmp.lt.s32.totalorder %s14, 3
      %p102 = pnand %p100, %p101
      %p103 = pneg %p102
      // Predicated region
      $region9: #{tpu_custom_call.1} parent=5 // pred_check
        _
      $region10: #{tpu_custom_call.1} parent=5 // pred_check_branch
        %105 = sbr.rel (%p102) target = $region12
      $region11: #{tpu_custom_call.1} parent=5 // pred_region
        %s106 = ssub.s32 %s14, 1
      $region12: #{tpu_custom_call.1} parent=5 // pred_fallthru
        _
      %p107 = scmp.lt.s32.totalorder %s14, 2
      // Predicated region
      $region13: #{tpu_custom_call.1} parent=5 // pred_check
        %p108 = pneg %p107
      $region14: #{tpu_custom_call.1} parent=5 // pred_check_branch
        %110 = sbr.rel (%p108) target = $region16
      $region15: #{tpu_custom_call.1} parent=5 // pred_region
        // Predicated region
        $region17: #{tpu_custom_call.1} parent=15 // pred_check
          %p111 = pneg %p34
        $region18: #{tpu_custom_call.1} parent=15 // pred_check_branch
          %113 = sbr.rel (%p111) target = $region20
        $region19: #{tpu_custom_call.1} parent=15 // pred_region
          %s114 = sand.u32 %s24, 1
          %s115 = scalar_lea.sflag [#allocation3], %s114
          %s116 = sand.u32 %s24, 1
          %s117 = smul.addr %s116, 8
          %s118 = scalar_lea.vmem [#allocation2], %s117
          %s120 = ssub.s32 128, 128
          %121 = vsyncadd %s115, %s120
          %s122 = smul.addr %s14, 128
          %s123 = scalar_lea.hbm %s0, %s122
          %s125 = sshll.u32 %s118, 4
          %s126 = int_to_ptr.vmem [resolvable:$true] %s125
          %128 = dma.hbm_to_vmem [thread:$0]  %s123, 128, %s126, %s115
        $region20: #{tpu_custom_call.1} parent=15 // pred_fallthru
          _
        // Predicated region
        $region21: #{tpu_custom_call.1} parent=15 // pred_check
          %p129 = pneg %p60
        $region22: #{tpu_custom_call.1} parent=15 // pred_check_branch
          %131 = sbr.rel (%p129) target = $region24
        $region23: #{tpu_custom_call.1} parent=15 // pred_region
          %s132 = sand.u32 %s50, 1
          %s133 = scalar_lea.sflag [#allocation5], %s132
          %s134 = sand.u32 %s50, 1
          %s135 = smul.addr %s134, 8
          %s136 = scalar_lea.vmem [#allocation4], %s135
          %s138 = ssub.s32 128, 128
          %139 = vsyncadd %s133, %s138
          %s140 = smul.addr %s14, 128
          %s141 = scalar_lea.hbm %s1, %s140
          %s143 = sshll.u32 %s136, 4
          %s144 = int_to_ptr.vmem [resolvable:$true] %s143
          %146 = dma.hbm_to_vmem [thread:$0]  %s141, 128, %s144, %s133
        $region24: #{tpu_custom_call.1} parent=15 // pred_fallthru
          _
      $region16: #{tpu_custom_call.1} parent=5 // pred_fallthru
        _
      %p147 = scmp.le.s32.totalorder 1, %s14
      %p148 = scmp.lt.s32.totalorder %s14, 3
      %p149 = pnand %p147, %p148
      %p150 = pneg %p149
      // Predicated region
      $region25: #{tpu_custom_call.1} parent=5 // pred_check
        _
      $region26: #{tpu_custom_call.1} parent=5 // pred_check_branch
        %152 = sbr.rel (%p149) target = $region28
      $region27: #{tpu_custom_call.1} parent=5 // pred_region
        %s153 = ssub.s32 %s14, 1
        %s154 = sand.u32 %s27, 1
        %s155 = scalar_lea.sflag [#allocation3], %s154
        %s156 = sand.u32 %s27, 1
        %s157 = smul.addr %s156, 8
        %s158 = scalar_lea.vmem [#allocation2], %s157
        // Predicated region
        $region29: #{tpu_custom_call.1} parent=27 // pred_check
          %p159 = pneg %p40
        $region30: #{tpu_custom_call.1} parent=27 // pred_check_branch
          %161 = sbr.rel (%p159) target = $region32
        $region31: #{tpu_custom_call.1} parent=27 // pred_region
          %162 = dma.done %s155, 128
        $region32: #{tpu_custom_call.1} parent=27 // pred_fallthru
          _
        %s163 = sand.u32 %s53, 1
        %s164 = scalar_lea.sflag [#allocation5], %s163
        %s165 = sand.u32 %s53, 1
        %s166 = smul.addr %s165, 8
        %s167 = scalar_lea.vmem [#allocation4], %s166
        // Predicated region
        $region33: #{tpu_custom_call.1} parent=27 // pred_check
          %p168 = pneg %p66
        $region34: #{tpu_custom_call.1} parent=27 // pred_check_branch
          %170 = sbr.rel (%p168) target = $region36
        $region35: #{tpu_custom_call.1} parent=27 // pred_region
          %171 = dma.done %s164, 128
        $region36: #{tpu_custom_call.1} parent=27 // pred_fallthru
          _
        %s172 = sand.u32 %s27, 1
        %s173 = scalar_lea.sflag [#allocation3], %s172
        %s174 = sand.u32 %s27, 1
        %s175 = smul.addr %s174, 8
        %s176 = scalar_lea.vmem [#allocation2], %s175
        %p177 = pneg %p40
        %p178 = pneg %p37
        %s179 = sand.u32 %s53, 1
        %s180 = scalar_lea.sflag [#allocation5], %s179
        %s181 = sand.u32 %s53, 1
        %s182 = smul.addr %s181, 8
        %s183 = scalar_lea.vmem [#allocation4], %s182
        %p184 = pneg %p66
        %p185 = pneg %p63
        %p186 = pneg %p92
        %p187 = pneg %p89
        %p188 = scmp.lt.s32.totalorder %s19, 1
        %s189 = scalar_select %p188, %s19, 1
        %s190 = smul.addr %s189, 8
        %s191 = scalar_lea.vmem %s2, %s190
        %p192 = scmp.lt.s32.totalorder %s19, 1
        %s193 = scalar_select %p192, %s19, 1
        %s194 = smul.addr %s193, 8
        %s195 = scalar_lea.vmem %s2, %s194
        %v196 = vld [vmem:[%s158] sm:$0xff]
        %vm197 = vcmask 261120
        %v198 = vsel %vm197, %v196, -inf
        %199 = vmax.xlane.f32.xlu0 %v198
        %v200 = vpop.xlane.xlu0 %199
        %v201 = vsub.f32 %v196, %v200
        %v202 = vld [vmem:[%s167] sm:$0xff]
        %v203 = vmul.f32 %v201, 1.442695
        %v204 = vpow.pop %v203
        %v205 = vsel %vm197, %v204, 0.0
        %206 = vadd.xlane.f32.xlu0 %v205
        %v207 = vpop.xlane.xlu0 %206
        %v208 = vlog2.pop %v207
        %v209 = vmul.f32 %v208, 0.6931472
        %v210 = vsel %vm197, %v202, 0.0
        %211 = vadd.xlane.f32.xlu0 %v210
        %v212 = vpop.xlane.xlu0 %211
        %v213 = vmul.f32 %v202, %v201
        %v214 = vsel %vm197, %v213, 0.0
        %215 = vadd.xlane.f32.xlu0 %v214
        %v216 = vpop.xlane.xlu0 %215
        %v217 = vmul.f32 %v209, %v212
        %v218 = vsub.f32 %v217, %v216
        %vm219 = vcmask 7168
        %220 = vst.msk [vmem:[%s195] sm:$0xff] %vm219, %v218
        %p221 = scmp.lt.s32.totalorder %s19, 1
        %s222 = scalar_select %p221, %s19, 1
        %s223 = smul.addr %s222, 8
        %s224 = scalar_lea.vmem %s2, %s223
        // Predicated region
        $region37: #{tpu_custom_call.1} parent=27 // pred_check
          %p225 = pneg %p89
        $region38: #{tpu_custom_call.1} parent=27 // pred_check_branch
          %227 = sbr.rel (%p225) target = $region40
        $region39: #{tpu_custom_call.1} parent=27 // pred_region
          _
        $region40: #{tpu_custom_call.1} parent=27 // pred_fallthru
          _
      $region28: #{tpu_custom_call.1} parent=5 // pred_fallthru
        _
      %p228 = scmp.le.s32.totalorder 2, %s14
      // Predicated region
      $region41: #{tpu_custom_call.1} parent=5 // pred_check
        %p229 = pneg %p228
      $region42: #{tpu_custom_call.1} parent=5 // pred_check_branch
        %231 = sbr.rel (%p229) target = $region44
      $region43: #{tpu_custom_call.1} parent=5 // pred_region
        %s232 = ssub.s32 %s14, 2
        // Predicated region
        $region45: #{tpu_custom_call.1} parent=43 // pred_check
          %p233 = pneg %p95
        $region46: #{tpu_custom_call.1} parent=43 // pred_check_branch
          %235 = sbr.rel (%p233) target = $region48
        $region47: #{tpu_custom_call.1} parent=43 // pred_region
          %p236 = scmp.lt.s32.totalorder %s20, 1
          %s237 = scalar_select %p236, %s20, 1
          %s238 = smul.addr %s237, 8
          %s239 = scalar_lea.vmem %s2, %s238
        $region48: #{tpu_custom_call.1} parent=43 // pred_fallthru
          _
      $region44: #{tpu_custom_call.1} parent=5 // pred_fallthru
        _
    $region6: #{tpu_custom_call.1} parent=1 // loop_footer
      %s18 = sadd.s32 1, %s14
    $region7: #{tpu_custom_call.1} parent=1 // loop_footer_branch
      %13 = sbr.rel target = $region3
    $region8: #{tpu_custom_call.1} parent=1 // loop_exit
      _
    %240 = vsyncpa [#allocation3], 1
    %s241 = scalar_lea.sflag [#allocation3], 1
    %242 = vsyncpa %s241, 1
    %243 = vsyncpa [#allocation5], 1
    %s244 = scalar_lea.sflag [#allocation5], 1
    %245 = vsyncpa %s244, 1

</llo_original>
